<compile_context>
chip_gen: v7x
topology: tpu7x:2x2x1
jax: 0.10.0
libtpu: 0.0.40
codegen_flags: <defaults>
</compile_context>

<pallas_src>
import functools

import jax
import jax.numpy as jnp
from jax.experimental import pallas as pl
from jax.experimental.pallas import tpu as pltpu


def _dropout_kernel(seed_ref, x_ref, o_ref, *, threshold: int, scale: float):
    """Elementwise dropout on one (block_rows, cols) tile.

    seed_ref : SMEM (1,) int32      -- PRNG seed
    x_ref    : VMEM (block_rows, C) -- input tile
    o_ref    : VMEM (block_rows, C) -- output tile
    """
    rows, cols = x_ref.shape

    # Global element index of every element in this tile (int32 iota is the
    # safest lowering path; wrap-around for >2^31 elements is fine for hashing).
    row = jax.lax.broadcasted_iota(jnp.int32, (rows, cols), 0)
    col = jax.lax.broadcasted_iota(jnp.int32, (rows, cols), 1)
    row = row + pl.program_id(0) * rows
    gidx = (row * cols + col).astype(jnp.uint32)

    # Stateless counter-based PRNG: "lowbias32" avalanche finalizer.
    # Different bits per element and per grid step (global index mixed in).
    h = gidx ^ seed_ref[0].astype(jnp.uint32)
    h = h ^ (h >> 16)
    h = h * jnp.uint32(0x7FEB352D)
    h = h ^ (h >> 15)
    h = h * jnp.uint32(0x846CA68B)
    h = h ^ (h >> 16)

    # P(keep) = (2^32 - threshold) / 2^32 = 1 - p  (uint compare, no f32 convert).
    keep = h >= jnp.uint32(threshold)

    xv = x_ref[...].astype(jnp.float32)
    o_ref[...] = jnp.where(keep, xv * jnp.float32(scale),
                           jnp.float32(0.0)).astype(o_ref.dtype)


def dropout2(x, p, *, training: bool = True, seed: int = 0):
    """JAX/Pallas equivalent of Dropout2.forward.

    `p` may be a float or anything float()-convertible (e.g. a ScheduledFloat
    stand-in); matches `float(self.p)` in the PyTorch module.
    """
    p = float(p)
    if (not training) or p == 0.0:
        # F.dropout is identity in eval mode / p == 0.
        return x
    assert 0.0 <= p < 1.0, p

    orig_shape = x.shape
    orig_dtype = x.dtype
    n = int(x.size)
    if n == 0:
        return x

    itemsize = jnp.dtype(orig_dtype).itemsize
    # Sublane granularity accounting for sub-32-bit packing (f32:8, bf16:16, i8:32).
    sub_mult = 8 * max(1, 4 // itemsize)

    flat = x.reshape(-1)

    # Lane-dense width that divides n exactly -> no pad / no extra HBM pass.
    cols = None
    for c in (1024, 512, 256, 128):
        if n % c == 0:
            cols = c
            break
    if cols is None:
        # Ragged tail: pad the flat view (rare for conv activations).
        # TODO(synk): could instead handle the tail with a masked final tile.
        cols = 128
        pad = (-n) % (cols * sub_mult)
        flat = jnp.pad(flat, (0, pad))
    rows = flat.shape[0] // cols
    x2d = flat.reshape(rows, cols)

    # ~2 MiB blocks (f32): fits v5e's 16 MiB / v7x's 32 MiB scoped VMEM with
    # in+out double-buffered, and amortizes the ~0.35 us per-step overhead.
    target_rows = max(1, (2 * 1024 * 1024) // (cols * itemsize))
    if target_rows >= rows:
        block_rows = rows               # single block == full dim (always legal)
    else:
        block_rows = max(sub_mult, (target_rows // sub_mult) * sub_mult)
    grid = (pl.cdiv(rows, block_rows),)

    threshold = min(int(round(p * (1 << 32))), (1 << 32) - 1)
    scale = 1.0 / (1.0 - p)
    seed_arr = jnp.asarray([seed], dtype=jnp.int32)

    nbytes = n * itemsize
    out2d = pl.pallas_call(
        functools.partial(_dropout_kernel, threshold=threshold, scale=scale),
        out_shape=jax.ShapeDtypeStruct((rows, cols), orig_dtype),
        grid=grid,
        in_specs=[
            pl.BlockSpec(memory_space=pltpu.MemorySpace.SMEM),       # seed scalar
            pl.BlockSpec((block_rows, cols), lambda i: (i, 0)),      # x tile
        ],
        out_specs=pl.BlockSpec((block_rows, cols), lambda i: (i, 0)),
        compiler_params=pltpu.CompilerParams(
            dimension_semantics=("parallel",)),
        cost_estimate=pl.CostEstimate(
            flops=5 * n, transcendentals=0, bytes_accessed=2 * nbytes),
    )(seed_arr, x2d)

    out_flat = out2d.reshape(-1)
    if out_flat.shape[0] != n:
        out_flat = out_flat[:n]
    return out_flat.reshape(orig_shape)


if __name__ == "__main__":
    key = jax.random.PRNGKey(0)
    # NCHW input, consistent with conv-style usage in the source model.
    x = jax.random.normal(key, (2, 4, 16, 16), dtype=jnp.float32)
    p = 0.1

    # Training mode: dropout applied inside the Pallas kernel.
    y_train = jax.block_until_ready(dropout2(x, p, training=True, seed=1234))
    assert y_train.shape == x.shape and y_train.dtype == x.dtype

    # Kept elements must equal x * 1/(1-p); dropped elements must be exactly 0.
    scaled = x / (1.0 - p)
    is_kept = jnp.isclose(y_train, scaled, rtol=1e-5, atol=1e-6)
    is_dropped = y_train == 0.0
    assert bool(jnp.all(is_kept | is_dropped))
    # With p=0.1 over 2048 elements, a sane fraction should be dropped.
    drop_frac = float(jnp.mean((~is_kept).astype(jnp.float32)))
    assert 0.02 < drop_frac < 0.25, drop_frac

    # Ragged-size input (exercises the padding fallback path).
    x_r = jax.random.normal(jax.random.PRNGKey(1), (3, 5, 7, 11), dtype=jnp.float32)
    y_r = jax.block_until_ready(dropout2(x_r, p, training=True, seed=7))
    scaled_r = x_r / (1.0 - p)
    ok_r = jnp.isclose(y_r, scaled_r, rtol=1e-5, atol=1e-6) | (y_r == 0.0)
    assert y_r.shape == x_r.shape and bool(jnp.all(ok_r))

    # Eval mode: identity.
    y_eval = jax.block_until_ready(dropout2(x, p, training=False))
    assert bool(jnp.all(y_eval == x))

    # p == 0 in training mode: identity as well.
    y_p0 = jax.block_until_ready(dropout2(x, 0.0, training=True))
    assert bool(jnp.all(y_p0 == x))

    print("KERNEL_OK")
</pallas_src>

<mosaic_0001>
module attributes {stable_mosaic.version = 11 : i64} {
  func.func @_dropout_kernel(%arg0: i32, %arg1: memref<1xi32, #tpu.memory_space<smem>>, %arg2: memref<2x1024xf32, #tpu.memory_space<vmem>>, %arg3: memref<2x1024xf32, #tpu.memory_space<vmem>>) attributes {dimension_semantics = [#tpu.dimension_semantics<parallel>], iteration_bounds = array<i64: 1>, scalar_prefetch = 0 : i64, scratch_operands = 0 : i64, tpu.core_type = #tpu.core_type<tc>, window_params = [{transform_indices = @transform_0, window_bounds = array<i64: 1>}, {transform_indices = @transform_1, window_bounds = array<i64: 2, 1024>}, {transform_indices = @transform_2, window_bounds = array<i64: 2, 1024>}]} {
    %0 = tpu.iota {dimensions = array<i32: 0>} : vector<2x1024xi32>
    %1 = tpu.iota {dimensions = array<i32: 1>} : vector<2x1024xi32>
    %c2_i32 = arith.constant 2 : i32
    %2 = arith.muli %arg0, %c2_i32 : i32
    %3 = vector.broadcast %2 : i32 to vector<2x1024xi32>
    %4 = arith.addi %0, %3 : vector<2x1024xi32>
    %c1024_i32 = arith.constant 1024 : i32
    %5 = vector.broadcast %c1024_i32 : i32 to vector<2x1024xi32>
    %6 = arith.muli %4, %5 : vector<2x1024xi32>
    %7 = arith.addi %6, %1 : vector<2x1024xi32>
    %c0 = arith.constant 0 : index
    %8 = memref.load %arg1[%c0] : memref<1xi32, #tpu.memory_space<smem>>
    %9 = vector.broadcast %8 : i32 to vector<2x1024xi32>
    %10 = arith.xori %7, %9 : vector<2x1024xi32>
    %c16_i32 = arith.constant 16 : i32
    %11 = vector.broadcast %c16_i32 : i32 to vector<2x1024xi32>
    %12 = arith.shrui %10, %11 : vector<2x1024xi32>
    %13 = arith.xori %10, %12 : vector<2x1024xi32>
    %c2146121005_i32 = arith.constant 2146121005 : i32
    %14 = vector.broadcast %c2146121005_i32 : i32 to vector<2x1024xi32>
    %15 = arith.muli %13, %14 : vector<2x1024xi32>
    %c15_i32 = arith.constant 15 : i32
    %16 = vector.broadcast %c15_i32 : i32 to vector<2x1024xi32>
    %17 = arith.shrui %15, %16 : vector<2x1024xi32>
    %18 = arith.xori %15, %17 : vector<2x1024xi32>
    %c-2073254261_i32 = arith.constant -2073254261 : i32
    %19 = vector.broadcast %c-2073254261_i32 : i32 to vector<2x1024xi32>
    %20 = arith.muli %18, %19 : vector<2x1024xi32>
    %c16_i32_0 = arith.constant 16 : i32
    %21 = vector.broadcast %c16_i32_0 : i32 to vector<2x1024xi32>
    %22 = arith.shrui %20, %21 : vector<2x1024xi32>
    %23 = arith.xori %20, %22 : vector<2x1024xi32>
    %c429496730_i32 = arith.constant 429496730 : i32
    %24 = vector.broadcast %c429496730_i32 : i32 to vector<2x1024xi32>
    %25 = arith.cmpi uge, %23, %24 : vector<2x1024xi32>
    %c0_1 = arith.constant 0 : index
    %c0_2 = arith.constant 0 : index
    %26 = vector.load %arg2[%c0_1, %c0_2] : memref<2x1024xf32, #tpu.memory_space<vmem>>, vector<2x1024xf32>
    %cst = arith.constant 1.11111116 : f32
    %27 = vector.broadcast %cst : f32 to vector<2x1024xf32>
    %28 = arith.mulf %26, %27 : vector<2x1024xf32>
    %cst_3 = arith.constant 0.000000e+00 : f32
    %29 = vector.broadcast %cst_3 : f32 to vector<2x1024xf32>
    %30 = arith.select %25, %28, %29 : vector<2x1024xi1>, vector<2x1024xf32>
    %c0_4 = arith.constant 0 : index
    %c0_5 = arith.constant 0 : index
    %31 = vector.load %arg3[%c0_4, %c0_5] : memref<2x1024xf32, #tpu.memory_space<vmem>>, vector<2x1024xf32>
    tpu.vector_store %arg3[%c0_4, %c0_5], %30 {strides = array<i32>} : memref<2x1024xf32, #tpu.memory_space<vmem>>, vector<2x1024xf32>,
    return
  }
  func.func @transform_0(%arg0: i32) -> i32 {
    %c0_i32 = arith.constant 0 : i32
    %c0_i32_0 = arith.constant 0 : i32
    return %c0_i32 : i32
  }
  func.func @transform_1(%arg0: i32) -> (i32, i32) {
    %c0_i32 = arith.constant 0 : i32
    %c0_i32_0 = arith.constant 0 : i32
    return %arg0, %c0_i32 : i32, i32
  }
  func.func @transform_2(%arg0: i32) -> (i32, i32) {
    %c0_i32 = arith.constant 0 : i32
    %c0_i32_0 = arith.constant 0 : i32
    return %arg0, %c0_i32 : i32, i32
  }
}

</mosaic_0001>

<llo_original>
// kernel: tpu_custom_call.1
$region0: #{tpu_custom_call.1}
  #allocation0 [shape = 'u32[]', space=smem, size = 0x4, offset = 0x4, fixed_abs, tag = 'smem constant byte address 0x4 - core index']
  #allocation1 [shape = 'u32[144,128]{1,0:T(1,128)}', space=vmem, size = 0x12000, scoped, tag = 'internal scratch']
  #allocation2 [shape = 's32[1]{0:T(128)S(6)}', space=smem, size = 0x200, scoped, tag = 'scoped memory for tpu_custom_call.1']
  %s0 = inlined_call_operand.<no memory space> [shape: s32[1], index: 0, kind: input, shape index: {}]
  %s1 = inlined_call_operand.hbm [shape: f32[2,1024], index: 1, kind: input, shape index: {}]
  %s2 = inlined_call_operand.hbm [shape: f32[2,1024], index: 2, kind: output, shape index: {}]
  %s3 = sld [smem:[#allocation0]]
  $region22: #{tpu_custom_call.1} parent=0
    _
  %s5 = ssub.s32 1, %s3
  %s6 = scalar_select 0, %s5, %s3
  %7 = sst [smem:[#allocation2]] %s0
  $region1: #{tpu_custom_call.1} parent=0
    #allocation3 [shape = 'u8[8192]{0}', space=vmem, size = 0x2000, scoped, tag = 'input window, operand 1, single buffered']
    #allocation4 [shape = 's32[1]{0}', space=sflag, size = 0x4, scoped, tag = 'scoped memory for tpu_custom_call.1']
    #allocation5 [shape = 's32[1]{0}', space=sflag, size = 0x4, scoped, tag = 'scoped memory for tpu_custom_call.1']
    #allocation6 [shape = 'u8[8192]{0}', space=vmem, size = 0x2000, scoped, tag = 'output window, operand 0, single buffered']
    %8 = vsyncpa [#allocation4], 0
    %9 = vsyncpa [#allocation5], 0
    // Predicated region
    $region2: #{tpu_custom_call.1} parent=1 // pred_check
      _
    $region3: #{tpu_custom_call.1} parent=1 // pred_check_branch
      %11 = sbr.rel (0) target = $region5
    $region4: #{tpu_custom_call.1} parent=1 // pred_region
      _
    $region5: #{tpu_custom_call.1} parent=1 // pred_fallthru
      _
    // Predicated region
    $region6: #{tpu_custom_call.1} parent=1 // pred_check
      _
    $region7: #{tpu_custom_call.1} parent=1 // pred_check_branch
      %13 = sbr.rel (0) target = $region9
    $region8: #{tpu_custom_call.1} parent=1 // pred_region
      %s15 = ssub.s32 256, 256
      %16 = vsyncadd [#allocation4], %s15
      %s18 = sshll.u32 [#allocation3], 4
      %s19 = int_to_ptr.vmem [resolvable:$true] %s18
      %21 = dma.hbm_to_vmem [thread:$0]  %s1, 256, %s19, [#allocation4]
    $region9: #{tpu_custom_call.1} parent=1 // pred_fallthru
      _
    // Predicated region
    $region10: #{tpu_custom_call.1} parent=1 // pred_check
      _
    $region11: #{tpu_custom_call.1} parent=1 // pred_check_branch
      %23 = sbr.rel (0) target = $region13
    $region12: #{tpu_custom_call.1} parent=1 // pred_region
      %24 = dma.done [#allocation4], 256
    $region13: #{tpu_custom_call.1} parent=1 // pred_fallthru
      _
    %v25 = vlaneseq
    %v26 = vshrl.u32 %v25, 7
    %v27 = vlaneseq
    %v28 = vand.u32 %v27, 127
    %v29 = vadd.s32 %v28, 128
    %v30 = vadd.s32 %v28, 256
    %v31 = vadd.s32 %v28, 384
    %v32 = vadd.s32 %v28, 512
    %v33 = vadd.s32 %v28, 640
    %v34 = vadd.s32 %v28, 768
    %v35 = vadd.s32 %v28, 896
    %s36 = smul.u32 0, 2
    %v37 = vstv %s36
    %v38 = vadd.s32 %v26, %v37
    %v39 = vmul.u32 %v38, 1024
    %v40 = vadd.s32 %v39, %v28
    %v41 = vadd.s32 %v39, %v29
    %v42 = vadd.s32 %v39, %v30
    %v43 = vadd.s32 %v39, %v31
    %v44 = vadd.s32 %v39, %v32
    %v45 = vadd.s32 %v39, %v33
    %v46 = vadd.s32 %v39, %v34
    %v47 = vadd.s32 %v39, %v35
    %s48 = sld [smem:[#allocation2]]
    %v49 = vstv %s48
    %v50 = vxor.u32 %v40, %v49
    %v51 = vxor.u32 %v41, %v49
    %v52 = vxor.u32 %v42, %v49
    %v53 = vxor.u32 %v43, %v49
    %v54 = vxor.u32 %v44, %v49
    %v55 = vxor.u32 %v45, %v49
    %v56 = vxor.u32 %v46, %v49
    %v57 = vxor.u32 %v47, %v49
    %v58 = vshrl.u32 %v50, 16
    %v59 = vshrl.u32 %v51, 16
    %v60 = vshrl.u32 %v52, 16
    %v61 = vshrl.u32 %v53, 16
    %v62 = vshrl.u32 %v54, 16
    %v63 = vshrl.u32 %v55, 16
    %v64 = vshrl.u32 %v56, 16
    %v65 = vshrl.u32 %v57, 16
    %v66 = vxor.u32 %v50, %v58
    %v67 = vxor.u32 %v51, %v59
    %v68 = vxor.u32 %v52, %v60
    %v69 = vxor.u32 %v53, %v61
    %v70 = vxor.u32 %v54, %v62
    %v71 = vxor.u32 %v55, %v63
    %v72 = vxor.u32 %v56, %v64
    %v73 = vxor.u32 %v57, %v65
    %v74 = vmul.u32 %v66, 2146121005
    %v75 = vmul.u32 %v67, 2146121005
    %v76 = vmul.u32 %v68, 2146121005
    %v77 = vmul.u32 %v69, 2146121005
    %v78 = vmul.u32 %v70, 2146121005
    %v79 = vmul.u32 %v71, 2146121005
    %v80 = vmul.u32 %v72, 2146121005
    %v81 = vmul.u32 %v73, 2146121005
    %v82 = vshrl.u32 %v74, 15
    %v83 = vshrl.u32 %v75, 15
    %v84 = vshrl.u32 %v76, 15
    %v85 = vshrl.u32 %v77, 15
    %v86 = vshrl.u32 %v78, 15
    %v87 = vshrl.u32 %v79, 15
    %v88 = vshrl.u32 %v80, 15
    %v89 = vshrl.u32 %v81, 15
    %v90 = vxor.u32 %v74, %v82
    %v91 = vxor.u32 %v75, %v83
    %v92 = vxor.u32 %v76, %v84
    %v93 = vxor.u32 %v77, %v85
    %v94 = vxor.u32 %v78, %v86
    %v95 = vxor.u32 %v79, %v87
    %v96 = vxor.u32 %v80, %v88
    %v97 = vxor.u32 %v81, %v89
    %v98 = vmul.u32 %v90, 2221713035
    %v99 = vmul.u32 %v91, 2221713035
    %v100 = vmul.u32 %v92, 2221713035
    %v101 = vmul.u32 %v93, 2221713035
    %v102 = vmul.u32 %v94, 2221713035
    %v103 = vmul.u32 %v95, 2221713035
    %v104 = vmul.u32 %v96, 2221713035
    %v105 = vmul.u32 %v97, 2221713035
    %v106 = vshrl.u32 %v98, 16
    %v107 = vshrl.u32 %v99, 16
    %v108 = vshrl.u32 %v100, 16
    %v109 = vshrl.u32 %v101, 16
    %v110 = vshrl.u32 %v102, 16
    %v111 = vshrl.u32 %v103, 16
    %v112 = vshrl.u32 %v104, 16
    %v113 = vshrl.u32 %v105, 16
    %v114 = vxor.u32 %v98, %v106
    %v115 = vxor.u32 %v99, %v107
    %v116 = vxor.u32 %v100, %v108
    %v117 = vxor.u32 %v101, %v109
    %v118 = vxor.u32 %v102, %v110
    %v119 = vxor.u32 %v103, %v111
    %v120 = vxor.u32 %v104, %v112
    %v121 = vxor.u32 %v105, %v113
    %vm122 = vcmp.ge.u32.totalorder %v114, 429496730
    %vm123 = vcmp.ge.u32.totalorder %v115, 429496730
    %vm124 = vcmp.ge.u32.totalorder %v116, 429496730
    %vm125 = vcmp.ge.u32.totalorder %v117, 429496730
    %vm126 = vcmp.ge.u32.totalorder %v118, 429496730
    %vm127 = vcmp.ge.u32.totalorder %v119, 429496730
    %vm128 = vcmp.ge.u32.totalorder %v120, 429496730
    %vm129 = vcmp.ge.u32.totalorder %v121, 429496730
    %v130 = vld [vmem:[#allocation3] sm:$0xff]
    %v131 = vld [vmem:[#allocation3 + $0x8] sm:$0xff]
    %v132 = vmul.f32 %v130, 1.1111112
    %v133 = vmul.f32 %v131, 1.1111112
    %v136 = vcombine.high %v132, %v132
    %v138 = vunpack.c.l.s4 1983009808
    %v139 = vunpack.c.0.s8 %v138
    %v140 = vlaneseq
    %v141 = vshrl.u32 %v140, 7
    %v142 = vsub.s32 %v139, %v141
    %v143 = vrot.slane %v132, %v142
    %v145 = vunpack.c.l.s4 1983009808
    %v146 = vunpack.c.0.s8 %v145
    %v147 = vlaneseq
    %v148 = vshrl.u32 %v147, 7
    %v149 = vsub.s32 %v146, %v148
    %v150 = vrot.slane %v136, %v149
    %v151 = vcombine.high %v143, %v143
    %v152 = vcombine.high %v150, %v150
    %v153 = vcombine.high %v133, %v133
    %v155 = vunpack.c.l.s4 1983009808
    %v156 = vunpack.c.0.s8 %v155
    %v157 = vlaneseq
    %v158 = vshrl.u32 %v157, 7
    %v159 = vsub.s32 %v156, %v158
    %v160 = vrot.slane %v133, %v159
    %v162 = vunpack.c.l.s4 1983009808
    %v163 = vunpack.c.0.s8 %v162
    %v164 = vlaneseq
    %v165 = vshrl.u32 %v164, 7
    %v166 = vsub.s32 %v163, %v165
    %v167 = vrot.slane %v153, %v166
    %v168 = vcombine.high %v160, %v160
    %v169 = vcombine.high %v167, %v167
    %v178 = vsel %vm122, %v143, 0.0
    %v179 = vsel %vm123, %v151, 0.0
    %v180 = vsel %vm124, %v150, 0.0
    %v181 = vsel %vm125, %v152, 0.0
    %v182 = vsel %vm126, %v160, 0.0
    %v183 = vsel %vm127, %v168, 0.0
    %v184 = vsel %vm128, %v167, 0.0
    %v185 = vsel %vm129, %v169, 0.0
    %v194 = vcombine.low %v178, %v179
    %v195 = vcombine.low %v180, %v181
    %v197 = vunpack.c.l.s4 1983009808
    %v198 = vunpack.c.0.s8 %v197
    %v199 = vlaneseq
    %v200 = vshrl.u32 %v199, 7
    %v201 = vsub.s32 %v198, %v200
    %v202 = vrot.slane %v194, %v201
    %v204 = vunpack.c.l.s4 1983009808
    %v205 = vunpack.c.0.s8 %v204
    %v206 = vlaneseq
    %v207 = vshrl.u32 %v206, 7
    %v208 = vsub.s32 %v205, %v207
    %v209 = vrot.slane %v195, %v208
    %v210 = vcombine.low %v202, %v209
    %v211 = vcombine.low %v182, %v183
    %v212 = vcombine.low %v184, %v185
    %v214 = vunpack.c.l.s4 1983009808
    %v215 = vunpack.c.0.s8 %v214
    %v216 = vlaneseq
    %v217 = vshrl.u32 %v216, 7
    %v218 = vsub.s32 %v215, %v217
    %v219 = vrot.slane %v211, %v218
    %v221 = vunpack.c.l.s4 1983009808
    %v222 = vunpack.c.0.s8 %v221
    %v223 = vlaneseq
    %v224 = vshrl.u32 %v223, 7
    %v225 = vsub.s32 %v222, %v224
    %v226 = vrot.slane %v212, %v225
    %v227 = vcombine.low %v219, %v226
    %230 = vst [vmem:[#allocation6] sm:$0xff] %v210
    %231 = vst [vmem:[#allocation6 + $0x8] sm:$0xff] %v227
    // Predicated region
    $region14: #{tpu_custom_call.1} parent=1 // pred_check
      _
    $region15: #{tpu_custom_call.1} parent=1 // pred_check_branch
      %233 = sbr.rel (0) target = $region17
    $region16: #{tpu_custom_call.1} parent=1 // pred_region
      %s235 = ssub.s32 256, 256
      %236 = vsyncadd [#allocation5], %s235
      %s238 = sshll.u32 [#allocation6], 4
      %s239 = int_to_ptr.vmem [resolvable:$true] %s238
      %241 = dma.vmem_to_hbm [thread:$0]  %s239, 256, %s2, [#allocation5]
    $region17: #{tpu_custom_call.1} parent=1 // pred_fallthru
      _
    // Predicated region
    $region18: #{tpu_custom_call.1} parent=1 // pred_check
      _
    $region19: #{tpu_custom_call.1} parent=1 // pred_check_branch
      %243 = sbr.rel (0) target = $region21
    $region20: #{tpu_custom_call.1} parent=1 // pred_region
      %244 = dma.done [#allocation5], 256
    $region21: #{tpu_custom_call.1} parent=1 // pred_fallthru
      _
    %245 = vsyncpa [#allocation4], 1
    %246 = vsyncpa [#allocation5], 1

</llo_original>
